<compile_context>
chip_gen: v7x
topology: tpu7x:2x2x1
jax: 0.10.0
libtpu: 0.0.40
codegen_flags: <defaults>
</compile_context>

<pallas_src>
import math
import functools

import jax
import jax.numpy as jnp
from jax import lax
from jax.experimental import pallas as pl
from jax.experimental.pallas import tpu as pltpu


# ----------------------------------------------------------------------------
# Parameter / buffer setup (mirrors PositionalEncoding.__init__)
# ----------------------------------------------------------------------------
def make_positional_encoding_table(d_model: int, max_len: int = 5000) -> jnp.ndarray:
    """Builds the (max_len, 1, d_model) sinusoidal table exactly like the torch code."""
    position = jnp.arange(0, max_len, dtype=jnp.float32)[:, None]            # (max_len, 1)
    div_term = jnp.exp(
        jnp.arange(0, d_model, 2, dtype=jnp.float32) * (-math.log(10000.0) / d_model)
    )                                                                         # (d_model//2,)
    pe = jnp.zeros((max_len, d_model), dtype=jnp.float32)
    pe = pe.at[:, 0::2].set(jnp.sin(position * div_term))
    pe = pe.at[:, 1::2].set(jnp.cos(position * div_term))
    # torch: pe.unsqueeze(0).transpose(0, 1) -> (max_len, 1, d_model)
    return pe[:, None, :]


# ----------------------------------------------------------------------------
# Pallas kernel: out = dropout(x + pe[:seq_len])   (one (TS, B, D) tile per step)
# ----------------------------------------------------------------------------
def _pe_add_dropout_kernel(seed_ref, x_ref, pe_ref, out_ref, *, p_drop, apply_dropout):
    # x_ref : (TS, B, D) in VMEM, pe_ref: (TS, 1, D) in VMEM.
    # Compute in x's dtype; pe broadcasts over the batch (sublane) axis implicitly.
    y = x_ref[...] + pe_ref[...]

    if apply_dropout and p_drop > 0.0:
        shp = y.shape
        # Per-element global counter: unique per element, per tile, per seed.
        i0 = lax.broadcasted_iota(jnp.int32, shp, 0)
        i1 = lax.broadcasted_iota(jnp.int32, shp, 1)
        i2 = lax.broadcasted_iota(jnp.int32, shp, 2)
        local = (i0 * shp[1] + i1) * shp[2] + i2                  # flat index in block
        block_elems = shp[0] * shp[1] * shp[2]

        tile = pl.program_id(0).astype(jnp.uint32)
        seed = seed_ref[0].astype(jnp.uint32)

        h = local.astype(jnp.uint32) + tile * jnp.uint32(block_elems)
        h = h ^ (seed * jnp.uint32(0x9E3779B1))
        # murmur3 fmix32 finalizer (pure VPU int ops -> lowers on Mosaic & interpret).
        h = h ^ (h >> 16)
        h = h * jnp.uint32(0x85EBCA6B)
        h = h ^ (h >> 13)
        h = h * jnp.uint32(0xC2B2AE35)
        h = h ^ (h >> 16)

        # Inverted dropout: keep with prob (1-p), scale kept values by 1/(1-p).
        thresh = jnp.uint32(min(int(p_drop * 4294967296.0), 0xFFFFFFFF))
        keep = h >= thresh
        scale = jnp.asarray(1.0 / (1.0 - p_drop), dtype=y.dtype)
        y = jnp.where(keep, y * scale, jnp.asarray(0, dtype=y.dtype))

    out_ref[...] = y.astype(out_ref.dtype)


def _choose_seq_tile(S, B, D, dtype, target_block_bytes=2 << 20):
    """Sequence-tile size so one x block is ~2 MiB: with double-buffered x/out
    plus the tiny pe block this stays well under the scoped VMEM budget on all
    generations (incl. v7x's 64 MiB physical / 32 MiB scoped)."""
    row_bytes = B * D * jnp.dtype(dtype).itemsize
    ts = max(1, target_block_bytes // max(1, row_bytes))
    return int(min(ts, S))


def positional_encoding_forward(x, pe_table, *, p_drop=0.1, training=True, seed=0,
                                seq_tile=None):
    """Forward pass of PositionalEncoding.

    x        : (seq_len, batch, d_model)
    pe_table : (max_len, 1, d_model) sinusoidal buffer
    """
    S, B, D = x.shape
    pe_slice = pe_table[:S].astype(x.dtype)          # (S, 1, D) == self.pe[:x.size(0), :]
    seed_arr = jnp.array([seed], dtype=jnp.int32)

    ts = _choose_seq_tile(S, B, D, x.dtype) if seq_tile is None else int(min(seq_tile, S))
    grid = (pl.cdiv(S, ts),)

    kernel = functools.partial(
        _pe_add_dropout_kernel, p_drop=float(p_drop), apply_dropout=bool(training)
    )

    return pl.pallas_call(
        kernel,
        grid=grid,
        out_shape=jax.ShapeDtypeStruct((S, B, D), x.dtype),
        in_specs=[
            pl.BlockSpec(memory_space=pltpu.MemorySpace.SMEM),     # seed scalar
            pl.BlockSpec((ts, B, D), lambda i: (i, 0, 0)),         # x tile
            pl.BlockSpec((ts, 1, D), lambda i: (i, 0, 0)),         # pe tile (tiny)
        ],
        out_specs=pl.BlockSpec((ts, B, D), lambda i: (i, 0, 0)),
        compiler_params=pltpu.CompilerParams(
            dimension_semantics=("parallel",),                     # megacore on v7x
        ),
    )(seed_arr, x, pe_slice)


# ----------------------------------------------------------------------------
# Demo / smoke test
# ----------------------------------------------------------------------------
if __name__ == "__main__":
    SEQ, BATCH, D_MODEL = 8, 2, 32
    MAX_LEN = 128                               # buffer length (torch default is 5000)
    P_DROP = 0.1

    key = jax.random.PRNGKey(0)
    x = jax.random.normal(key, (SEQ, BATCH, D_MODEL), dtype=jnp.float32)
    pe_table = make_positional_encoding_table(D_MODEL, MAX_LEN)

    # --- Eval-mode pass (dropout is identity): check against pure-JAX reference.
    out_eval = jax.block_until_ready(
        positional_encoding_forward(x, pe_table, p_drop=P_DROP, training=False)
    )
    ref_eval = x + pe_table[:SEQ]               # broadcast over batch
    assert out_eval.shape == x.shape and out_eval.dtype == x.dtype
    assert jnp.allclose(out_eval, ref_eval, atol=1e-6, rtol=1e-6)

    # --- Training-mode pass (in-kernel hashed dropout, deterministic seed).
    out_train = jax.block_until_ready(
        positional_encoding_forward(x, pe_table, p_drop=P_DROP, training=True, seed=1234)
    )
    assert out_train.shape == x.shape and out_train.dtype == x.dtype
    scaled = ref_eval / (1.0 - P_DROP)
    is_kept = jnp.isclose(out_train, scaled, atol=1e-5, rtol=1e-5)
    is_dropped = out_train == 0.0
    assert bool(jnp.all(is_kept | is_dropped))

    # --- Multi-tile grid path: force a small sequence tile to exercise the grid.
    S2, B2 = 32, 4
    x2 = jax.random.normal(jax.random.PRNGKey(1), (S2, B2, D_MODEL), dtype=jnp.float32)
    ref2 = x2 + pe_table[:S2]
    out2 = jax.block_until_ready(
        positional_encoding_forward(x2, pe_table, p_drop=P_DROP, training=False, seq_tile=8)
    )
    assert jnp.allclose(out2, ref2, atol=1e-6, rtol=1e-6)

    out2t = jax.block_until_ready(
        positional_encoding_forward(x2, pe_table, p_drop=P_DROP, training=True,
                                    seed=7, seq_tile=8)
    )
    ok2 = jnp.isclose(out2t, ref2 / (1.0 - P_DROP), atol=1e-5, rtol=1e-5) | (out2t == 0.0)
    assert bool(jnp.all(ok2))

    print("KERNEL_OK")
</pallas_src>

<mosaic_0001>
module attributes {stable_mosaic.version = 11 : i64} {
  func.func @_pe_add_dropout_kernel(%arg0: i32, %arg1: memref<1xi32, #tpu.memory_space<smem>>, %arg2: memref<8x2x32xf32, #tpu.memory_space<vmem>>, %arg3: memref<8x1x32xf32, #tpu.memory_space<vmem>>, %arg4: memref<8x2x32xf32, #tpu.memory_space<vmem>>) attributes {dimension_semantics = [#tpu.dimension_semantics<parallel>], iteration_bounds = array<i64: 1>, scalar_prefetch = 0 : i64, scratch_operands = 0 : i64, tpu.core_type = #tpu.core_type<tc>, window_params = [{transform_indices = @transform_0, window_bounds = array<i64: 1>}, {transform_indices = @transform_1, window_bounds = array<i64: 8, 2, 32>}, {transform_indices = @transform_2, window_bounds = array<i64: 8, 1, 32>}, {transform_indices = @transform_3, window_bounds = array<i64: 8, 2, 32>}]} {
    %c0 = arith.constant 0 : index
    %c0_0 = arith.constant 0 : index
    %c0_1 = arith.constant 0 : index
    %0 = vector.load %arg2[%c0, %c0_0, %c0_1] : memref<8x2x32xf32, #tpu.memory_space<vmem>>, vector<8x2x32xf32>
    %c0_2 = arith.constant 0 : index
    %c0_3 = arith.constant 0 : index
    %c0_4 = arith.constant 0 : index
    %1 = vector.load %arg3[%c0_2, %c0_3, %c0_4] : memref<8x1x32xf32, #tpu.memory_space<vmem>>, vector<8x1x32xf32>
    %2 = vector.broadcast %1 : vector<8x1x32xf32> to vector<8x2x32xf32>
    %3 = arith.addf %0, %2 : vector<8x2x32xf32>
    %c0_5 = arith.constant 0 : index
    %c0_6 = arith.constant 0 : index
    %c0_7 = arith.constant 0 : index
    %4 = vector.load %arg4[%c0_5, %c0_6, %c0_7] : memref<8x2x32xf32, #tpu.memory_space<vmem>>, vector<8x2x32xf32>
    tpu.vector_store %arg4[%c0_5, %c0_6, %c0_7], %3 {strides = array<i32>} : memref<8x2x32xf32, #tpu.memory_space<vmem>>, vector<8x2x32xf32>,
    return
  }
  func.func @transform_0(%arg0: i32) -> i32 {
    %c0_i32 = arith.constant 0 : i32
    %c0_i32_0 = arith.constant 0 : i32
    return %c0_i32 : i32
  }
  func.func @transform_1(%arg0: i32) -> (i32, i32, i32) {
    %c0_i32 = arith.constant 0 : i32
    %c0_i32_0 = arith.constant 0 : i32
    %c0_i32_1 = arith.constant 0 : i32
    return %arg0, %c0_i32, %c0_i32_0 : i32, i32, i32
  }
  func.func @transform_2(%arg0: i32) -> (i32, i32, i32) {
    %c0_i32 = arith.constant 0 : i32
    %c0_i32_0 = arith.constant 0 : i32
    %c0_i32_1 = arith.constant 0 : i32
    return %arg0, %c0_i32, %c0_i32_0 : i32, i32, i32
  }
  func.func @transform_3(%arg0: i32) -> (i32, i32, i32) {
    %c0_i32 = arith.constant 0 : i32
    %c0_i32_0 = arith.constant 0 : i32
    %c0_i32_1 = arith.constant 0 : i32
    return %arg0, %c0_i32, %c0_i32_0 : i32, i32, i32
  }
}

</mosaic_0001>

<llo_original>
// kernel: tpu_custom_call.1
$region0: #{tpu_custom_call.1}
  #allocation0 [shape = 'u32[]', space=smem, size = 0x4, offset = 0x4, fixed_abs, tag = 'smem constant byte address 0x4 - core index']
  #allocation1 [shape = 'u32[144,128]{1,0:T(1,128)}', space=vmem, size = 0x12000, scoped, tag = 'internal scratch']
  #allocation2 [shape = 's32[1]{0:T(128)S(6)}', space=smem, size = 0x200, scoped, tag = 'scoped memory for tpu_custom_call.1']
  %s0 = inlined_call_operand.<no memory space> [shape: s32[1], index: 0, kind: input, shape index: {}]
  %s1 = inlined_call_operand.hbm [shape: f32[8,2,32], index: 1, kind: input, shape index: {}]
  %s2 = inlined_call_operand.hbm [shape: f32[8,1,32], index: 2, kind: input, shape index: {}]
  %s3 = inlined_call_operand.hbm [shape: f32[8,2,32], index: 3, kind: output, shape index: {}]
  %s4 = sld [smem:[#allocation0]]
  $region30: #{tpu_custom_call.1} parent=0
    _
  %s6 = ssub.s32 1, %s4
  %s7 = scalar_select 0, %s6, %s4
  %8 = sst [smem:[#allocation2]] %s0
  $region1: #{tpu_custom_call.1} parent=0
    #allocation3 [shape = 'u8[8192]{0}', space=vmem, size = 0x2000, scoped, tag = 'input window, operand 1, single buffered']
    #allocation4 [shape = 's32[1]{0}', space=sflag, size = 0x4, scoped, tag = 'scoped memory for tpu_custom_call.1']
    #allocation5 [shape = 's32[1]{0}', space=sflag, size = 0x4, scoped, tag = 'scoped memory for tpu_custom_call.1']
    #allocation6 [shape = 'u8[4096]{0}', space=vmem, size = 0x1000, scoped, tag = 'input window, operand 2, single buffered']
    #allocation7 [shape = 's32[1]{0}', space=sflag, size = 0x4, scoped, tag = 'scoped memory for tpu_custom_call.1']
    #allocation8 [shape = 'u8[8192]{0}', space=vmem, size = 0x2000, scoped, tag = 'output window, operand 0, single buffered']
    %9 = vsyncpa [#allocation4], 0
    %10 = vsyncpa [#allocation7], 0
    %11 = vsyncpa [#allocation5], 0
    // Predicated region
    $region2: #{tpu_custom_call.1} parent=1 // pred_check
      _
    $region3: #{tpu_custom_call.1} parent=1 // pred_check_branch
      %13 = sbr.rel (0) target = $region5
    $region4: #{tpu_custom_call.1} parent=1 // pred_region
      _
    $region5: #{tpu_custom_call.1} parent=1 // pred_fallthru
      _
    // Predicated region
    $region6: #{tpu_custom_call.1} parent=1 // pred_check
      _
    $region7: #{tpu_custom_call.1} parent=1 // pred_check_branch
      %15 = sbr.rel (0) target = $region9
    $region8: #{tpu_custom_call.1} parent=1 // pred_region
      %s17 = ssub.s32 256, 256
      %18 = vsyncadd [#allocation4], %s17
      %s19 = sshll.u32 [#allocation3], 4
      %s20 = int_to_ptr.vmem [resolvable:$true] %s19
      %25 = dma.hbm_to_vmem [thread:$0]  %s1, 256, %s20, [#allocation4], 32, 32, 2
    $region9: #{tpu_custom_call.1} parent=1 // pred_fallthru
      _
    // Predicated region
    $region10: #{tpu_custom_call.1} parent=1 // pred_check
      _
    $region11: #{tpu_custom_call.1} parent=1 // pred_check_branch
      %27 = sbr.rel (0) target = $region13
    $region12: #{tpu_custom_call.1} parent=1 // pred_region
      %s29 = ssub.s32 128, 128
      %30 = vsyncadd [#allocation7], %s29
      %s31 = sshll.u32 [#allocation6], 4
      %s32 = int_to_ptr.vmem [resolvable:$true] %s31
      %37 = dma.hbm_to_vmem [thread:$0]  %s2, 128, %s32, [#allocation7], 16, 16, 1
    $region13: #{tpu_custom_call.1} parent=1 // pred_fallthru
      _
    // Predicated region
    $region14: #{tpu_custom_call.1} parent=1 // pred_check
      _
    $region15: #{tpu_custom_call.1} parent=1 // pred_check_branch
      %39 = sbr.rel (0) target = $region17
    $region16: #{tpu_custom_call.1} parent=1 // pred_region
      %40 = dma.done [#allocation4], 256
    $region17: #{tpu_custom_call.1} parent=1 // pred_fallthru
      _
    // Predicated region
    $region18: #{tpu_custom_call.1} parent=1 // pred_check
      _
    $region19: #{tpu_custom_call.1} parent=1 // pred_check_branch
      %42 = sbr.rel (0) target = $region21
    $region20: #{tpu_custom_call.1} parent=1 // pred_region
      %43 = dma.done [#allocation7], 128
    $region21: #{tpu_custom_call.1} parent=1 // pred_fallthru
      _
    %v44 = vld [vmem:[#allocation3] sm:$0x3]
    %v45 = vld [vmem:[#allocation3 + $0x2] sm:$0x3]
    %v46 = vld [vmem:[#allocation3 + $0x4] sm:$0x3]
    %v47 = vld [vmem:[#allocation3 + $0x6] sm:$0x3]
    %v48 = vld [vmem:[#allocation3 + $0x8] sm:$0x3]
    %v49 = vld [vmem:[#allocation3 + $0xa] sm:$0x3]
    %v50 = vld [vmem:[#allocation3 + $0xc] sm:$0x3]
    %v51 = vld [vmem:[#allocation3 + $0xe] sm:$0x3]
    %v52 = vld [vmem:[#allocation6] sm:$0x1]
    %v53 = vld [vmem:[#allocation6 + $0x1] sm:$0x1]
    %v54 = vld [vmem:[#allocation6 + $0x2] sm:$0x1]
    %v55 = vld [vmem:[#allocation6 + $0x3] sm:$0x1]
    %v56 = vld [vmem:[#allocation6 + $0x4] sm:$0x1]
    %v57 = vld [vmem:[#allocation6 + $0x5] sm:$0x1]
    %v58 = vld [vmem:[#allocation6 + $0x6] sm:$0x1]
    %v59 = vld [vmem:[#allocation6 + $0x7] sm:$0x1]
    %v68 = vlaneseq
    %v69 = vshrl.u32 %v68, 7
    %v70 = vsub.s32 0, %v69
    %v71 = vrot.slane %v52, %v70
    %v72 = vlaneseq
    %v73 = vshrl.u32 %v72, 7
    %v74 = vsub.s32 0, %v73
    %v75 = vrot.slane %v53, %v74
    %v76 = vlaneseq
    %v77 = vshrl.u32 %v76, 7
    %v78 = vsub.s32 0, %v77
    %v79 = vrot.slane %v54, %v78
    %v80 = vlaneseq
    %v81 = vshrl.u32 %v80, 7
    %v82 = vsub.s32 0, %v81
    %v83 = vrot.slane %v55, %v82
    %v84 = vlaneseq
    %v85 = vshrl.u32 %v84, 7
    %v86 = vsub.s32 0, %v85
    %v87 = vrot.slane %v56, %v86
    %v88 = vlaneseq
    %v89 = vshrl.u32 %v88, 7
    %v90 = vsub.s32 0, %v89
    %v91 = vrot.slane %v57, %v90
    %v92 = vlaneseq
    %v93 = vshrl.u32 %v92, 7
    %v94 = vsub.s32 0, %v93
    %v95 = vrot.slane %v58, %v94
    %v96 = vlaneseq
    %v97 = vshrl.u32 %v96, 7
    %v98 = vsub.s32 0, %v97
    %v99 = vrot.slane %v59, %v98
    %v108 = vadd.f32 %v44, %v71
    %v109 = vadd.f32 %v45, %v75
    %v110 = vadd.f32 %v46, %v79
    %v111 = vadd.f32 %v47, %v83
    %v112 = vadd.f32 %v48, %v87
    %v113 = vadd.f32 %v49, %v91
    %v114 = vadd.f32 %v50, %v95
    %v115 = vadd.f32 %v51, %v99
    %vm116 = vcmask 254976
    %117 = vst.msk [vmem:[#allocation8] sm:$0x3] %vm116, %v108
    %118 = vst.msk [vmem:[#allocation8 + $0x2] sm:$0x3] %vm116, %v109
    %119 = vst.msk [vmem:[#allocation8 + $0x4] sm:$0x3] %vm116, %v110
    %120 = vst.msk [vmem:[#allocation8 + $0x6] sm:$0x3] %vm116, %v111
    %121 = vst.msk [vmem:[#allocation8 + $0x8] sm:$0x3] %vm116, %v112
    %122 = vst.msk [vmem:[#allocation8 + $0xa] sm:$0x3] %vm116, %v113
    %123 = vst.msk [vmem:[#allocation8 + $0xc] sm:$0x3] %vm116, %v114
    %124 = vst.msk [vmem:[#allocation8 + $0xe] sm:$0x3] %vm116, %v115
    // Predicated region
    $region22: #{tpu_custom_call.1} parent=1 // pred_check
      _
    $region23: #{tpu_custom_call.1} parent=1 // pred_check_branch
      %126 = sbr.rel (0) target = $region25
    $region24: #{tpu_custom_call.1} parent=1 // pred_region
      %s128 = ssub.s32 256, 256
      %129 = vsyncadd [#allocation5], %s128
      %s130 = sshll.u32 [#allocation8], 4
      %s131 = int_to_ptr.vmem [resolvable:$true] %s130
      %136 = dma.vmem_to_hbm [thread:$0]  %s131, 256, %s3, [#allocation5], 32, 32, 2
    $region25: #{tpu_custom_call.1} parent=1 // pred_fallthru
      _
    // Predicated region
    $region26: #{tpu_custom_call.1} parent=1 // pred_check
      _
    $region27: #{tpu_custom_call.1} parent=1 // pred_check_branch
      %138 = sbr.rel (0) target = $region29
    $region28: #{tpu_custom_call.1} parent=1 // pred_region
      %139 = dma.done [#allocation5], 256
    $region29: #{tpu_custom_call.1} parent=1 // pred_fallthru
      _
    %140 = vsyncpa [#allocation4], 1
    %141 = vsyncpa [#allocation7], 1
    %142 = vsyncpa [#allocation5], 1

</llo_original>
